<compile_context>
chip_gen: v6e
topology: v6e:2x2x1
jax: 0.10.0
libtpu: 0.0.40
codegen_flags: <defaults>
</compile_context>

<pallas_src>
import math

import jax
import jax.numpy as jnp
from jax.experimental import pallas as pl
from jax.experimental.pallas import tpu as pltpu


_INV_SQRT2 = 0.7071067811865476


def _round_up(x, m):
    return ((x + m - 1) // m) * m


def _choose_tiles(n, hw, r):
    """Pick (t_hw, n_tiles, hw_pad): tile count first, then tile size."""
    unit = r * 128                       # minimum spatial tile: R sublanes x 128 lanes
    cap = 16 * 1024                      # lanes per grid step (post-MXU-fix cap)
    hw_al = _round_up(hw, unit)
    n_units = hw_al // unit
    min_tiles = 2 if n == 1 else 1       # v7x megacore occupancy for tiny batch
    n_tiles = max(pl.cdiv(hw_al, cap), min_tiles)
    n_tiles = min(n_tiles, n_units)
    t_hw = _round_up(pl.cdiv(hw_al, n_tiles), unit)
    n_tiles = pl.cdiv(hw_al, t_hw)
    hw_pad = n_tiles * t_hw
    return t_hw, n_tiles, hw_pad


def _resconv1x_kernel(x_ref, w1_ref, b1_ref, w2_ref, b2_ref, o_ref):
    """One (batch, spatial-tile) block of the fused 1x1-conv residual block.

    x_ref : (C_in, R, chunk)         input / skip tile (chunk on lanes)
    w1_ref: (R*Hid, R*C_in)          conv1 weight, block-diag kron(W1^T, I_R)
    b1_ref: (R*Hid, 1)               conv1 bias column (f32)
    w2_ref: (R*C_out, R*Hid)         conv2 weight, block-diag kron(W2^T, I_R)
    b2_ref: (R*C_out, 1)             conv2 bias column (f32)
    o_ref : (C_out, R, chunk)        output tile
    """
    c_in, r, chunk = x_ref.shape
    c_out = o_ref.shape[0]

    x = x_ref[...]
    # Merge the R folded spatial positions into the sublane/contraction axis.
    # (R, chunk) is exactly one sublane tile of the operand dtype, so this is
    # a free layout-preserving concat.
    xf = x.reshape(c_in * r, chunk)

    # conv1 (1x1) as a dense-row MXU matmul (block-diagonal weights), f32 acc.
    h = jnp.dot(w1_ref[...], xf, preferred_element_type=jnp.float32)
    h = h + b1_ref[...]

    # SiLU via a single EUP transcendental: sigmoid(h) = 0.5*tanh(0.5*h)+0.5.
    h = h * (0.5 * jnp.tanh(0.5 * h) + 0.5)

    # conv2 (1x1); operands in weight dtype (bf16 stays bf16), f32 accumulate.
    y = jnp.dot(w2_ref[...], h.astype(w2_ref.dtype),
                preferred_element_type=jnp.float32)
    y = y + b2_ref[...]

    # CombineResidualWithSkip (project_skip=False): (residual + skip)/sqrt(2).
    out = (y + xf.astype(jnp.float32)) * jnp.float32(_INV_SQRT2)
    o_ref[...] = out.reshape(c_out, r, chunk).astype(o_ref.dtype)


@jax.jit
def resconv1x_pallas(x_nchw, w1, b1, w2, b2):
    """x_nchw: (N, C_in, H, W); w1: (C_in, Hid); w2: (Hid, C_out).

    Returns (N, C_out, H, W).  Requires C_in == C_out (project_skip=False).
    """
    n, c_in, hh, ww = x_nchw.shape
    hidden = w1.shape[1]
    c_out = w2.shape[1]
    assert c_in == c_out, "residual add requires in_channels == out_channels"

    dtype = x_nchw.dtype
    # Fold factor = one sublane tile of the operand dtype so the in-kernel
    # (C, R, chunk) -> (C*R, chunk) merge is layout-free.
    r = 16 if dtype == jnp.bfloat16 else 8

    hw = hh * ww
    t_hw, n_tiles, hw_pad = _choose_tiles(n, hw, r)
    chunk = t_hw // r
    n_chunks = hw_pad // chunk

    # View as [N, C, HW]; pad the spatial axis only if it is not aligned.
    x3d = x_nchw.reshape(n, c_in, hw)
    if hw_pad != hw:
        x3d = jnp.pad(x3d, ((0, 0), (0, 0), (0, hw_pad - hw)))
    x4d = x3d.reshape(n, c_in, n_chunks, chunk)

    # One-time weight prep: transpose for left-multiply, expand to block
    # diagonal over the R folded spatial positions, tile the biases to match.
    # Matmul operands follow the model dtype; biases stay f32 (added into the
    # f32 accumulator).
    eye_r = jnp.eye(r, dtype=jnp.float32)
    w1_bd = jnp.kron(jnp.transpose(w1).astype(jnp.float32), eye_r).astype(dtype)
    w2_bd = jnp.kron(jnp.transpose(w2).astype(jnp.float32), eye_r).astype(dtype)
    b1_bd = jnp.repeat(b1.astype(jnp.float32), r).reshape(hidden * r, 1)
    b2_bd = jnp.repeat(b2.astype(jnp.float32), r).reshape(c_out * r, 1)

    grid = (n, n_tiles)

    out4d = pl.pallas_call(
        _resconv1x_kernel,
        out_shape=jax.ShapeDtypeStruct((n, c_out, n_chunks, chunk), dtype),
        grid=grid,
        in_specs=[
            pl.BlockSpec((pl.Squeezed(), c_in, r, chunk),
                         lambda b, j: (b, 0, j, 0)),                    # x tile
            pl.BlockSpec((hidden * r, c_in * r), lambda b, j: (0, 0)),  # w1 bd
            pl.BlockSpec((hidden * r, 1), lambda b, j: (0, 0)),         # b1
            pl.BlockSpec((c_out * r, hidden * r), lambda b, j: (0, 0)), # w2 bd
            pl.BlockSpec((c_out * r, 1), lambda b, j: (0, 0)),          # b2
        ],
        out_specs=pl.BlockSpec((pl.Squeezed(), c_out, r, chunk),
                               lambda b, j: (b, 0, j, 0)),
        compiler_params=pltpu.CompilerParams(
            dimension_semantics=("parallel", "parallel"),
            vmem_limit_bytes=32 * 1024 * 1024),
    )(x4d, w1_bd, b1_bd, w2_bd, b2_bd)

    out3d = out4d.reshape(n, c_out, hw_pad)
    if hw_pad != hw:
        out3d = out3d[:, :, :hw]
    return out3d.reshape(n, c_out, hh, ww)


def _reference(x_nchw, w1, b1, w2, b2):
    """Pure-JAX reference of the PyTorch forward pass (NCHW, f32)."""
    n, c_in, hh, ww = x_nchw.shape
    c_out = w2.shape[1]
    x3d = x_nchw.reshape(n, c_in, hh * ww).astype(jnp.float32)
    h = jnp.einsum("io,nis->nos", w1.astype(jnp.float32), x3d) + b1[None, :, None]
    h = h * jax.nn.sigmoid(h)
    y = jnp.einsum("hc,nhs->ncs", w2.astype(jnp.float32), h) + b2[None, :, None]
    out = (y + x3d) / math.sqrt(2.0)
    return out.reshape(n, c_out, hh, ww).astype(x_nchw.dtype)


def _run_case(key, n, c, hh, ww, hidden):
    kx, k1, kb1, k2, kb2 = jax.random.split(key, 5)
    x = jax.random.normal(kx, (n, c, hh, ww), dtype=jnp.float32)
    # Variance-scaling-style weights in matmul layout [C_in, C_out]; nonzero
    # biases so the bias path is exercised.
    # TODO(synk): module's default_init uses scale=1e-10 (weights ~ 0); we use
    # O(1) weights here so the kernel's compute path is actually exercised.
    w1 = jax.random.normal(k1, (c, hidden), jnp.float32) / math.sqrt(c)
    b1 = 0.1 * jax.random.normal(kb1, (hidden,), jnp.float32)
    w2 = jax.random.normal(k2, (hidden, c), jnp.float32) / math.sqrt(hidden)
    b2 = 0.1 * jax.random.normal(kb2, (c,), jnp.float32)

    out = jax.block_until_ready(resconv1x_pallas(x, w1, b1, w2, b2))
    ref = _reference(x, w1, b1, w2, b2)
    assert out.shape == ref.shape
    assert jnp.allclose(out, ref, atol=5e-5, rtol=5e-5), (
        f"mismatch vs reference, max abs err {jnp.max(jnp.abs(out - ref))}")


if __name__ == "__main__":
    # ResConv1x(in_channels=4, hidden_layer_size=32, out_channels=4,
    #           kernel_dim=2, act_fun=silu, project_skip=False)
    key = jax.random.PRNGKey(0)
    k_small, k_pad = jax.random.split(key)

    # Small module-spec case: single spatial tile, padded 256 -> 1024 lanes.
    _run_case(k_small, 2, 4, 16, 16, 32)
    # N=1 with non-aligned HW: exercises padding, multi-tile grid and the
    # two-tile megacore-occupancy path.
    _run_case(k_pad, 1, 4, 48, 48, 32)

    print("KERNEL_OK")
</pallas_src>

<mosaic_0001>
module attributes {stable_mosaic.version = 11 : i64} {
  func.func @_resconv1x_kernel(%arg0: i32, %arg1: i32, %arg2: memref<1x4x8x128xf32, #tpu.memory_space<vmem>>, %arg3: memref<256x32xf32, #tpu.memory_space<vmem>>, %arg4: memref<256x1xf32, #tpu.memory_space<vmem>>, %arg5: memref<32x256xf32, #tpu.memory_space<vmem>>, %arg6: memref<32x1xf32, #tpu.memory_space<vmem>>, %arg7: memref<1x4x8x128xf32, #tpu.memory_space<vmem>>) attributes {dimension_semantics = [#tpu.dimension_semantics<parallel>, #tpu.dimension_semantics<parallel>], iteration_bounds = array<i64: 2, 1>, scalar_prefetch = 0 : i64, scratch_operands = 0 : i64, tpu.core_type = #tpu.core_type<tc>, window_params = [{transform_indices = @transform_0, window_bounds = array<i64: 1, 4, 8, 128>}, {pipeline_mode = #tpu.pipeline_mode<synchronous>, transform_indices = @transform_1, window_bounds = array<i64: 256, 32>}, {pipeline_mode = #tpu.pipeline_mode<synchronous>, transform_indices = @transform_2, window_bounds = array<i64: 256, 1>}, {pipeline_mode = #tpu.pipeline_mode<synchronous>, transform_indices = @transform_3, window_bounds = array<i64: 32, 256>}, {pipeline_mode = #tpu.pipeline_mode<synchronous>, transform_indices = @transform_4, window_bounds = array<i64: 32, 1>}, {transform_indices = @transform_5, window_bounds = array<i64: 1, 4, 8, 128>}]} {
    %c0 = arith.constant 0 : index
    %c0_0 = arith.constant 0 : index
    %c0_1 = arith.constant 0 : index
    %c0_2 = arith.constant 0 : index
    %0 = vector.load %arg2[%c0, %c0_0, %c0_1, %c0_2] : memref<1x4x8x128xf32, #tpu.memory_space<vmem>>, vector<1x4x8x128xf32>
    %1 = vector.shape_cast %0 : vector<1x4x8x128xf32> to vector<4x8x128xf32>
    %2 = vector.shape_cast %1 : vector<4x8x128xf32> to vector<32x128xf32>
    %c0_3 = arith.constant 0 : index
    %c0_4 = arith.constant 0 : index
    %3 = vector.load %arg3[%c0_3, %c0_4] : memref<256x32xf32, #tpu.memory_space<vmem>>, vector<256x32xf32>
    %cst = arith.constant dense<0.000000e+00> : vector<256x128xf32>
    %4 = tpu.matmul %3, %2, %cst {dimension_numbers = #tpu.dot_dimension_numbers<[1], [0], [0], [1], [0, 0, 1, 1], [], []>} : vector<256x32xf32>, vector<32x128xf32>, vector<256x128xf32> -> vector<256x128xf32>
    %c0_5 = arith.constant 0 : index
    %c0_6 = arith.constant 0 : index
    %5 = vector.load %arg4[%c0_5, %c0_6] : memref<256x1xf32, #tpu.memory_space<vmem>>, vector<256x1xf32>
    %6 = vector.broadcast %5 : vector<256x1xf32> to vector<256x128xf32>
    %7 = arith.addf %4, %6 : vector<256x128xf32>
    %cst_7 = arith.constant 5.000000e-01 : f32
    %8 = vector.broadcast %cst_7 : f32 to vector<256x128xf32>
    %9 = arith.mulf %8, %7 : vector<256x128xf32>
    %10 = math.tanh %9 : vector<256x128xf32>
    %cst_8 = arith.constant 5.000000e-01 : f32
    %11 = vector.broadcast %cst_8 : f32 to vector<256x128xf32>
    %12 = arith.mulf %11, %10 : vector<256x128xf32>
    %cst_9 = arith.constant 5.000000e-01 : f32
    %13 = vector.broadcast %cst_9 : f32 to vector<256x128xf32>
    %14 = arith.addf %12, %13 : vector<256x128xf32>
    %15 = arith.mulf %7, %14 : vector<256x128xf32>
    %c0_10 = arith.constant 0 : index
    %c0_11 = arith.constant 0 : index
    %16 = vector.load %arg5[%c0_10, %c0_11] : memref<32x256xf32, #tpu.memory_space<vmem>>, vector<32x256xf32>
    %cst_12 = arith.constant dense<0.000000e+00> : vector<32x128xf32>
    %17 = tpu.matmul %16, %15, %cst_12 {dimension_numbers = #tpu.dot_dimension_numbers<[1], [0], [0], [1], [0, 0, 1, 1], [], []>} : vector<32x256xf32>, vector<256x128xf32>, vector<32x128xf32> -> vector<32x128xf32>
    %c0_13 = arith.constant 0 : index
    %c0_14 = arith.constant 0 : index
    %18 = vector.load %arg6[%c0_13, %c0_14] : memref<32x1xf32, #tpu.memory_space<vmem>>, vector<32x1xf32>
    %19 = vector.broadcast %18 : vector<32x1xf32> to vector<32x128xf32>
    %20 = arith.addf %17, %19 : vector<32x128xf32>
    %21 = arith.addf %20, %2 : vector<32x128xf32>
    %cst_15 = arith.constant 0.707106769 : f32
    %22 = vector.broadcast %cst_15 : f32 to vector<32x128xf32>
    %23 = arith.mulf %21, %22 : vector<32x128xf32>
    %24 = vector.shape_cast %23 : vector<32x128xf32> to vector<4x8x128xf32>
    %c0_16 = arith.constant 0 : index
    %c0_17 = arith.constant 0 : index
    %c0_18 = arith.constant 0 : index
    %c0_19 = arith.constant 0 : index
    %25 = vector.load %arg7[%c0_16, %c0_17, %c0_18, %c0_19] : memref<1x4x8x128xf32, #tpu.memory_space<vmem>>, vector<1x4x8x128xf32>
    %26 = vector.shape_cast %25 : vector<1x4x8x128xf32> to vector<4x8x128xf32>
    %27 = vector.shape_cast %24 : vector<4x8x128xf32> to vector<1x4x8x128xf32>
    tpu.vector_store %arg7[%c0_16, %c0_17, %c0_18, %c0_19], %27 {strides = array<i32>} : memref<1x4x8x128xf32, #tpu.memory_space<vmem>>, vector<1x4x8x128xf32>,
    return
  }
  func.func @transform_0(%arg0: i32, %arg1: i32) -> (i32, i32, i32, i32) {
    %c0_i32 = arith.constant 0 : i32
    %c0_i32_0 = arith.constant 0 : i32
    %c0_i32_1 = arith.constant 0 : i32
    return %arg0, %c0_i32, %arg1, %c0_i32_0 : i32, i32, i32, i32
  }
  func.func @transform_1(%arg0: i32, %arg1: i32) -> (i32, i32) {
    %c0_i32 = arith.constant 0 : i32
    %c0_i32_0 = arith.constant 0 : i32
    %c0_i32_1 = arith.constant 0 : i32
    return %c0_i32, %c0_i32_0 : i32, i32
  }
  func.func @transform_2(%arg0: i32, %arg1: i32) -> (i32, i32) {
    %c0_i32 = arith.constant 0 : i32
    %c0_i32_0 = arith.constant 0 : i32
    %c0_i32_1 = arith.constant 0 : i32
    return %c0_i32, %c0_i32_0 : i32, i32
  }
  func.func @transform_3(%arg0: i32, %arg1: i32) -> (i32, i32) {
    %c0_i32 = arith.constant 0 : i32
    %c0_i32_0 = arith.constant 0 : i32
    %c0_i32_1 = arith.constant 0 : i32
    return %c0_i32, %c0_i32_0 : i32, i32
  }
  func.func @transform_4(%arg0: i32, %arg1: i32) -> (i32, i32) {
    %c0_i32 = arith.constant 0 : i32
    %c0_i32_0 = arith.constant 0 : i32
    %c0_i32_1 = arith.constant 0 : i32
    return %c0_i32, %c0_i32_0 : i32, i32
  }
  func.func @transform_5(%arg0: i32, %arg1: i32) -> (i32, i32, i32, i32) {
    %c0_i32 = arith.constant 0 : i32
    %c0_i32_0 = arith.constant 0 : i32
    %c0_i32_1 = arith.constant 0 : i32
    return %arg0, %c0_i32, %arg1, %c0_i32_0 : i32, i32, i32, i32
  }
}

</mosaic_0001>

<llo_original>
// kernel: resconv1x_pallas.1
$region0: #{resconv1x_pallas.1}
  #allocation0 [shape = 'u32[]', space=smem, size = 0x4, offset = 0x4, fixed_abs, tag = 'smem constant byte address 0x4 - core index']
  #allocation1 [shape = 'u32[144,128]{1,0:T(1,128)}', space=vmem, size = 0x12000, scoped, tag = 'internal scratch']
  %s0 = inlined_call_operand.vmem [shape: f32[2,4,8,128], index: 0, kind: input, shape index: {}]
  %s1 = inlined_call_operand.vmem [shape: f32[256,32], index: 1, kind: input, shape index: {}]
  %s2 = inlined_call_operand.vmem [shape: f32[256,1], index: 2, kind: input, shape index: {}]
  %s3 = inlined_call_operand.vmem [shape: f32[32,256], index: 3, kind: input, shape index: {}]
  %s4 = inlined_call_operand.vmem [shape: f32[32,1], index: 4, kind: input, shape index: {}]
  %s5 = inlined_call_operand.vmem [shape: f32[2,4,8,128], index: 5, kind: output, shape index: {}]
  %s6 = sld [smem:[#allocation0]]
  $region53: #{resconv1x_pallas.1} parent=0
    _
  %s8 = ssub.s32 1, %s6
  %s9 = scalar_select 0, %s8, %s6
  loop: start=0, step=1, limit=4
  $region2: #{resconv1x_pallas.1} parent=0 // loop_pre_header
    _
  $region3: #{resconv1x_pallas.1} parent=0 // loop_header
    %s11 = sphi 0, %s15
    %p12 = scmp.ge.s32.totalorder %s11, 4
    %s18 = sphi 0, %s30
    %s19 = sphi 0, %s26
    %s20 = sphi 0, %s18
    %s21 = sphi 0, %s19
    %s22 = sphi 0, %s20
    %s23 = sphi 0, %s21
    %s35 = sphi 0, %s37
    %s38 = sphi 0, %s35
    %s39 = sphi 0, %s38
    %s55 = sphi 0, %s39
    %s59 = sphi 0, %s59
    %s61 = sphi 0, %s59
    %s62 = sphi 0, %s61
    %s76 = sphi 0, %s62
    %s80 = sphi 0, %s80
    %s82 = sphi 0, %s80
    %s83 = sphi 0, %s82
    %s97 = sphi 0, %s83
    %s101 = sphi 0, %s101
    %s103 = sphi 0, %s101
    %s104 = sphi 0, %s103
    %s118 = sphi 0, %s104
    %s122 = sphi 0, %s122
    %s124 = sphi 0, %s122
    %s125 = sphi 0, %s124
    %s139 = sphi 0, %s125
    %s147 = sphi 0, %s149
    %s150 = sphi 0, %s147
    %s151 = sphi 0, %s150
    %s167 = sphi 0, %s151
  $region4: #{resconv1x_pallas.1} parent=0 // loop_header_branch
    %14 = sbr.rel (%p12) target = $region8
  $region5: #{resconv1x_pallas.1} parent=0 // loop_body
    %s16 = ssub.s32 %s11, 1
    %s17 = ssub.s32 %s11, 2
    %s24 = sadd.s32 1, %s19
    %p25 = scmp.ge.s32.totalorder %s24, 1
    %s26 = scalar_select %p25, 0, %s24
    %s27 = sadd.s32 1, %s18
    %s28 = scalar_select %p25, %s27, %s18
    %p29 = scmp.ge.s32.totalorder %s28, 2
    %s30 = scalar_select %p29, 0, %s28
    %s31 = ssub.s32 %s18, %s30
    %s32 = ssub.s32 %s19, %s26
    %s33 = sor.u32 %s31, %s32
    %p34 = scmp.eq.s32.totalorder %s33, 0
    %s36 = sadd.s32 %s35, 1
    %s37 = scalar_select %p34, %s35, %s36
    %p40 = pneg %p34
    %p41 = scmp.eq.s32.totalorder %s11, 1
    %p42 = por %p40, %p41
    %p43 = scmp.ne.s32.totalorder %s35, %s38
    %p44 = scmp.eq.s32.totalorder %s11, 0
    %p45 = por %p43, %p44
    %p46 = scmp.ne.s32.totalorder %s35, %s38
    %p47 = scmp.eq.s32.totalorder %s16, 1
    %p48 = por %p46, %p47
    %p49 = scmp.ne.s32.totalorder %s38, %s39
    %p50 = scmp.eq.s32.totalorder %s16, 0
    %p51 = por %p49, %p50
    %p52 = scmp.ne.s32.totalorder %s38, %s39
    %p53 = scmp.eq.s32.totalorder %s17, 1
    %p54 = por %p52, %p53
    %p56 = scmp.ne.s32.totalorder %s39, %s55
    %p57 = scmp.eq.s32.totalorder %s17, 0
    %p58 = por %p56, %p57
    %s60 = sadd.s32 %s59, 1
    %p63 = scmp.eq.s32.totalorder %s11, 1
    %p64 = scmp.ne.s32.totalorder %s59, %s61
    %p65 = scmp.eq.s32.totalorder %s11, 0
    %p66 = por %p64, %p65
    %p67 = scmp.ne.s32.totalorder %s59, %s61
    %p68 = scmp.eq.s32.totalorder %s16, 1
    %p69 = por %p67, %p68
    %p70 = scmp.ne.s32.totalorder %s61, %s62
    %p71 = scmp.eq.s32.totalorder %s16, 0
    %p72 = por %p70, %p71
    %p73 = scmp.ne.s32.totalorder %s61, %s62
    %p74 = scmp.eq.s32.totalorder %s17, 1
    %p75 = por %p73, %p74
    %p77 = scmp.ne.s32.totalorder %s62, %s76
    %p78 = scmp.eq.s32.totalorder %s17, 0
    %p79 = por %p77, %p78
    %s81 = sadd.s32 %s80, 1
    %p84 = scmp.eq.s32.totalorder %s11, 1
    %p85 = scmp.ne.s32.totalorder %s80, %s82
    %p86 = scmp.eq.s32.totalorder %s11, 0
    %p87 = por %p85, %p86
    %p88 = scmp.ne.s32.totalorder %s80, %s82
    %p89 = scmp.eq.s32.totalorder %s16, 1
    %p90 = por %p88, %p89
    %p91 = scmp.ne.s32.totalorder %s82, %s83
    %p92 = scmp.eq.s32.totalorder %s16, 0
    %p93 = por %p91, %p92
    %p94 = scmp.ne.s32.totalorder %s82, %s83
    %p95 = scmp.eq.s32.totalorder %s17, 1
    %p96 = por %p94, %p95
    %p98 = scmp.ne.s32.totalorder %s83, %s97
    %p99 = scmp.eq.s32.totalorder %s17, 0
    %p100 = por %p98, %p99
    %s102 = sadd.s32 %s101, 1
    %p105 = scmp.eq.s32.totalorder %s11, 1
    %p106 = scmp.ne.s32.totalorder %s101, %s103
    %p107 = scmp.eq.s32.totalorder %s11, 0
    %p108 = por %p106, %p107
    %p109 = scmp.ne.s32.totalorder %s101, %s103
    %p110 = scmp.eq.s32.totalorder %s16, 1
    %p111 = por %p109, %p110
    %p112 = scmp.ne.s32.totalorder %s103, %s104
    %p113 = scmp.eq.s32.totalorder %s16, 0
    %p114 = por %p112, %p113
    %p115 = scmp.ne.s32.totalorder %s103, %s104
    %p116 = scmp.eq.s32.totalorder %s17, 1
    %p117 = por %p115, %p116
    %p119 = scmp.ne.s32.totalorder %s104, %s118
    %p120 = scmp.eq.s32.totalorder %s17, 0
    %p121 = por %p119, %p120
    %s123 = sadd.s32 %s122, 1
    %p126 = scmp.eq.s32.totalorder %s11, 1
    %p127 = scmp.ne.s32.totalorder %s122, %s124
    %p128 = scmp.eq.s32.totalorder %s11, 0
    %p129 = por %p127, %p128
    %p130 = scmp.ne.s32.totalorder %s122, %s124
    %p131 = scmp.eq.s32.totalorder %s16, 1
    %p132 = por %p130, %p131
    %p133 = scmp.ne.s32.totalorder %s124, %s125
    %p134 = scmp.eq.s32.totalorder %s16, 0
    %p135 = por %p133, %p134
    %p136 = scmp.ne.s32.totalorder %s124, %s125
    %p137 = scmp.eq.s32.totalorder %s17, 1
    %p138 = por %p136, %p137
    %p140 = scmp.ne.s32.totalorder %s125, %s139
    %p141 = scmp.eq.s32.totalorder %s17, 0
    %p142 = por %p140, %p141
    %s143 = ssub.s32 %s18, %s30
    %s144 = ssub.s32 %s19, %s26
    %s145 = sor.u32 %s143, %s144
    %p146 = scmp.eq.s32.totalorder %s145, 0
    %s148 = sadd.s32 %s147, 1
    %s149 = scalar_select %p146, %s147, %s148
    %p152 = pneg %p146
    %p153 = scmp.eq.s32.totalorder %s11, 1
    %p154 = por %p152, %p153
    %p155 = scmp.ne.s32.totalorder %s147, %s150
    %p156 = scmp.eq.s32.totalorder %s11, 0
    %p157 = por %p155, %p156
    %p158 = scmp.ne.s32.totalorder %s147, %s150
    %p159 = scmp.eq.s32.totalorder %s16, 1
    %p160 = por %p158, %p159
    %p161 = scmp.ne.s32.totalorder %s150, %s151
    %p162 = scmp.eq.s32.totalorder %s16, 0
    %p163 = por %p161, %p162
    %p164 = scmp.ne.s32.totalorder %s150, %s151
    %p165 = scmp.eq.s32.totalorder %s17, 1
    %p166 = por %p164, %p165
    %p168 = scmp.ne.s32.totalorder %s151, %s167
    %p169 = scmp.eq.s32.totalorder %s17, 0
    %p170 = por %p168, %p169
    %p171 = scmp.le.s32.totalorder 1, %s11
    %p172 = scmp.lt.s32.totalorder %s11, 3
    %p173 = pnand %p171, %p172
    %p174 = pneg %p173
    // Predicated region
    $region9: #{resconv1x_pallas.1} parent=5 // pred_check
      _
    $region10: #{resconv1x_pallas.1} parent=5 // pred_check_branch
      %176 = sbr.rel (%p173) target = $region12
    $region11: #{resconv1x_pallas.1} parent=5 // pred_region
      %s177 = ssub.s32 %s11, 1
      // Predicated region
      $region13: #{resconv1x_pallas.1} parent=11 // pred_check
        %p178 = pneg %p72
      $region14: #{resconv1x_pallas.1} parent=11 // pred_check_branch
        %180 = sbr.rel (%p178) target = $region16
      $region15: #{resconv1x_pallas.1} parent=11 // pred_region
        _
      $region16: #{resconv1x_pallas.1} parent=11 // pred_fallthru
        _
      // Predicated region
      $region17: #{resconv1x_pallas.1} parent=11 // pred_check
        %p181 = pneg %p93
      $region18: #{resconv1x_pallas.1} parent=11 // pred_check_branch
        %183 = sbr.rel (%p181) target = $region20
      $region19: #{resconv1x_pallas.1} parent=11 // pred_region
        _
      $region20: #{resconv1x_pallas.1} parent=11 // pred_fallthru
        _
      // Predicated region
      $region21: #{resconv1x_pallas.1} parent=11 // pred_check
        %p184 = pneg %p114
      $region22: #{resconv1x_pallas.1} parent=11 // pred_check_branch
        %186 = sbr.rel (%p184) target = $region24
      $region23: #{resconv1x_pallas.1} parent=11 // pred_region
        _
      $region24: #{resconv1x_pallas.1} parent=11 // pred_fallthru
        _
      // Predicated region
      $region25: #{resconv1x_pallas.1} parent=11 // pred_check
        %p187 = pneg %p135
      $region26: #{resconv1x_pallas.1} parent=11 // pred_check_branch
        %189 = sbr.rel (%p187) target = $region28
      $region27: #{resconv1x_pallas.1} parent=11 // pred_region
        _
      $region28: #{resconv1x_pallas.1} parent=11 // pred_fallthru
        _
    $region12: #{resconv1x_pallas.1} parent=5 // pred_fallthru
      _
    %p190 = scmp.lt.s32.totalorder %s11, 2
    // Predicated region
    $region29: #{resconv1x_pallas.1} parent=5 // pred_check
      %p191 = pneg %p190
    $region30: #{resconv1x_pallas.1} parent=5 // pred_check_branch
      %193 = sbr.rel (%p191) target = $region32
    $region31: #{resconv1x_pallas.1} parent=5 // pred_region
      // Predicated region
      $region33: #{resconv1x_pallas.1} parent=31 // pred_check
        %p194 = pneg %p45
      $region34: #{resconv1x_pallas.1} parent=31 // pred_check_branch
        %196 = sbr.rel (%p194) target = $region36
      $region35: #{resconv1x_pallas.1} parent=31 // pred_region
        %p197 = scmp.lt.s32.totalorder %s18, 1
        %s198 = scalar_select %p197, %s18, 1
        %p199 = scmp.lt.s32.totalorder %s19, 0
        %s200 = scalar_select %p199, %s19, 0
        %s201 = smul.addr %s198, 4
        %s202 = sadd.s32 %s200, %s201
        %s203 = smul.addr %s202, 8
        %s204 = scalar_lea.vmem %s0, %s203
      $region36: #{resconv1x_pallas.1} parent=31 // pred_fallthru
        _
    $region32: #{resconv1x_pallas.1} parent=5 // pred_fallthru
      _
    %p205 = scmp.le.s32.totalorder 1, %s11
    %p206 = scmp.lt.s32.totalorder %s11, 3
    %p207 = pnand %p205, %p206
    %p208 = pneg %p207
    // Predicated region
    $region37: #{resconv1x_pallas.1} parent=5 // pred_check
      _
    $region38: #{resconv1x_pallas.1} parent=5 // pred_check_branch
      %210 = sbr.rel (%p207) target = $region40
    $region39: #{resconv1x_pallas.1} parent=5 // pred_region
      %s211 = ssub.s32 %s11, 1
      %p212 = scmp.lt.s32.totalorder %s20, 1
      %s213 = scalar_select %p212, %s20, 1
      %p214 = scmp.lt.s32.totalorder %s21, 0
      %s215 = scalar_select %p214, %s21, 0
      %s216 = smul.addr %s213, 4
      %s217 = sadd.s32 %s215, %s216
      %s218 = smul.addr %s217, 8
      %s219 = scalar_lea.vmem %s0, %s218
      %p220 = pneg %p51
      %p221 = pneg %p48
      %p222 = pneg %p72
      %p223 = pneg %p69
      %p224 = pneg %p93
      %p225 = pneg %p90
      %p226 = pneg %p114
      %p227 = pneg %p111
      %p228 = pneg %p135
      %p229 = pneg %p132
      %p230 = pneg %p163
      %p231 = pneg %p160
      %p232 = scmp.lt.s32.totalorder %s20, 1
      %s233 = scalar_select %p232, %s20, 1
      %p234 = scmp.lt.s32.totalorder %s21, 0
      %s235 = scalar_select %p234, %s21, 0
      %s236 = smul.addr %s233, 4
      %s237 = sadd.s32 %s235, %s236
      %s238 = smul.addr %s237, 8
      %s239 = scalar_lea.vmem %s5, %s238
      %p240 = scmp.lt.s32.totalorder %s20, 1
      %s241 = scalar_select %p240, %s20, 1
      %p242 = scmp.lt.s32.totalorder %s21, 0
      %s243 = scalar_select %p242, %s21, 0
      %s244 = smul.addr %s241, 4
      %s245 = sadd.s32 %s243, %s244
      %s246 = smul.addr %s245, 8
      %s247 = scalar_lea.vmem %s0, %s246
      %p248 = scmp.lt.s32.totalorder %s20, 1
      %s249 = scalar_select %p248, %s20, 1
      %p250 = scmp.lt.s32.totalorder %s21, 0
      %s251 = scalar_select %p250, %s21, 0
      %s252 = smul.addr %s249, 4
      %s253 = sadd.s32 %s251, %s252
      %s254 = smul.addr %s253, 8
      %s255 = scalar_lea.vmem %s5, %s254
      %v256 = vld [vmem:[%s247] sm:$0xff]
      %v257 = vld [vmem:[%s247 + $0x8] sm:$0xff]
      %v258 = vld [vmem:[%s247 + $0x10] sm:$0xff]
      %v259 = vld [vmem:[%s247 + $0x18] sm:$0xff]
      %v260 = vld [vmem:[%s1] sm:$0xff]
      %v261 = vld [vmem:[%s1 + $0x8] sm:$0xff]
      %v262 = vld [vmem:[%s1 + $0x10] sm:$0xff]
      %v263 = vld [vmem:[%s1 + $0x18] sm:$0xff]
      %v264 = vld [vmem:[%s1 + $0x20] sm:$0xff]
      %v265 = vld [vmem:[%s1 + $0x28] sm:$0xff]
      %v266 = vld [vmem:[%s1 + $0x30] sm:$0xff]
      %v267 = vld [vmem:[%s1 + $0x38] sm:$0xff]
      %v268 = vld [vmem:[%s1 + $0x40] sm:$0xff]
      %v269 = vld [vmem:[%s1 + $0x48] sm:$0xff]
      %v270 = vld [vmem:[%s1 + $0x50] sm:$0xff]
      %v271 = vld [vmem:[%s1 + $0x58] sm:$0xff]
      %v272 = vld [vmem:[%s1 + $0x60] sm:$0xff]
      %v273 = vld [vmem:[%s1 + $0x68] sm:$0xff]
      %v274 = vld [vmem:[%s1 + $0x70] sm:$0xff]
      %v275 = vld [vmem:[%s1 + $0x78] sm:$0xff]
      %v276 = vld [vmem:[%s1 + $0x80] sm:$0xff]
      %v277 = vld [vmem:[%s1 + $0x88] sm:$0xff]
      %v278 = vld [vmem:[%s1 + $0x90] sm:$0xff]
      %v279 = vld [vmem:[%s1 + $0x98] sm:$0xff]
      %v280 = vld [vmem:[%s1 + $0xa0] sm:$0xff]
      %v281 = vld [vmem:[%s1 + $0xa8] sm:$0xff]
      %v282 = vld [vmem:[%s1 + $0xb0] sm:$0xff]
      %v283 = vld [vmem:[%s1 + $0xb8] sm:$0xff]
      %v284 = vld [vmem:[%s1 + $0xc0] sm:$0xff]
      %v285 = vld [vmem:[%s1 + $0xc8] sm:$0xff]
      %v286 = vld [vmem:[%s1 + $0xd0] sm:$0xff]
      %v287 = vld [vmem:[%s1 + $0xd8] sm:$0xff]
      %v288 = vld [vmem:[%s1 + $0xe0] sm:$0xff]
      %v289 = vld [vmem:[%s1 + $0xe8] sm:$0xff]
      %v290 = vld [vmem:[%s1 + $0xf0] sm:$0xff]
      %v291 = vld [vmem:[%s1 + $0xf8] sm:$0xff]
      %v292 = vld [vmem:[%s2] sm:$0xff]
      %v293 = vld [vmem:[%s2 + $0x8] sm:$0xff]
      %v294 = vld [vmem:[%s2 + $0x10] sm:$0xff]
      %v295 = vld [vmem:[%s2 + $0x18] sm:$0xff]
      %v296 = vld [vmem:[%s2 + $0x20] sm:$0xff]
      %v297 = vld [vmem:[%s2 + $0x28] sm:$0xff]
      %v298 = vld [vmem:[%s2 + $0x30] sm:$0xff]
      %v299 = vld [vmem:[%s2 + $0x38] sm:$0xff]
      %v300 = vld [vmem:[%s2 + $0x40] sm:$0xff]
      %v301 = vld [vmem:[%s2 + $0x48] sm:$0xff]
      %v302 = vld [vmem:[%s2 + $0x50] sm:$0xff]
      %v303 = vld [vmem:[%s2 + $0x58] sm:$0xff]
      %v304 = vld [vmem:[%s2 + $0x60] sm:$0xff]
      %v305 = vld [vmem:[%s2 + $0x68] sm:$0xff]
      %v306 = vld [vmem:[%s2 + $0x70] sm:$0xff]
      %v307 = vld [vmem:[%s2 + $0x78] sm:$0xff]
      %v308 = vld [vmem:[%s2 + $0x80] sm:$0xff]
      %v309 = vld [vmem:[%s2 + $0x88] sm:$0xff]
      %v310 = vld [vmem:[%s2 + $0x90] sm:$0xff]
      %v311 = vld [vmem:[%s2 + $0x98] sm:$0xff]
      %v312 = vld [vmem:[%s2 + $0xa0] sm:$0xff]
      %v313 = vld [vmem:[%s2 + $0xa8] sm:$0xff]
      %v314 = vld [vmem:[%s2 + $0xb0] sm:$0xff]
      %v315 = vld [vmem:[%s2 + $0xb8] sm:$0xff]
      %v316 = vld [vmem:[%s2 + $0xc0] sm:$0xff]
      %v317 = vld [vmem:[%s2 + $0xc8] sm:$0xff]
      %v318 = vld [vmem:[%s2 + $0xd0] sm:$0xff]
      %v319 = vld [vmem:[%s2 + $0xd8] sm:$0xff]
      %v320 = vld [vmem:[%s2 + $0xe0] sm:$0xff]
      %v321 = vld [vmem:[%s2 + $0xe8] sm:$0xff]
      %v322 = vld [vmem:[%s2 + $0xf0] sm:$0xff]
      %v323 = vld [vmem:[%s2 + $0xf8] sm:$0xff]
      %325 = vset.pattern.permute.xlu0 0
      %326 = vperm.xlu0 %325, %v292
      %v327 = vpop.permute.xlu0 %326
      %330 = vset.pattern.permute.xlu0 0
      %331 = vperm.xlu0 %330, %v293
      %v332 = vpop.permute.xlu0 %331
      %335 = vset.pattern.permute.xlu0 0
      %336 = vperm.xlu0 %335, %v294
      %v337 = vpop.permute.xlu0 %336
      %340 = vset.pattern.permute.xlu0 0
      %341 = vperm.xlu0 %340, %v295
      %v342 = vpop.permute.xlu0 %341
      %345 = vset.pattern.permute.xlu0 0
      %346 = vperm.xlu0 %345, %v296
      %v347 = vpop.permute.xlu0 %346
      %350 = vset.pattern.permute.xlu0 0
      %351 = vperm.xlu0 %350, %v297
      %v352 = vpop.permute.xlu0 %351
      %355 = vset.pattern.permute.xlu0 0
      %356 = vperm.xlu0 %355, %v298
      %v357 = vpop.permute.xlu0 %356
      %360 = vset.pattern.permute.xlu0 0
      %361 = vperm.xlu0 %360, %v299
      %v362 = vpop.permute.xlu0 %361
      %365 = vset.pattern.permute.xlu0 0
      %366 = vperm.xlu0 %365, %v300
      %v367 = vpop.permute.xlu0 %366
      %370 = vset.pattern.permute.xlu0 0
      %371 = vperm.xlu0 %370, %v301
      %v372 = vpop.permute.xlu0 %371
      %375 = vset.pattern.permute.xlu0 0
      %376 = vperm.xlu0 %375, %v302
      %v377 = vpop.permute.xlu0 %376
      %380 = vset.pattern.permute.xlu0 0
      %381 = vperm.xlu0 %380, %v303
      %v382 = vpop.permute.xlu0 %381
      %385 = vset.pattern.permute.xlu0 0
      %386 = vperm.xlu0 %385, %v304
      %v387 = vpop.permute.xlu0 %386
      %390 = vset.pattern.permute.xlu0 0
      %391 = vperm.xlu0 %390, %v305
      %v392 = vpop.permute.xlu0 %391
      %395 = vset.pattern.permute.xlu0 0
      %396 = vperm.xlu0 %395, %v306
      %v397 = vpop.permute.xlu0 %396
      %400 = vset.pattern.permute.xlu0 0
      %401 = vperm.xlu0 %400, %v307
      %v402 = vpop.permute.xlu0 %401
      %405 = vset.pattern.permute.xlu0 0
      %406 = vperm.xlu0 %405, %v308
      %v407 = vpop.permute.xlu0 %406
      %410 = vset.pattern.permute.xlu0 0
      %411 = vperm.xlu0 %410, %v309
      %v412 = vpop.permute.xlu0 %411
      %415 = vset.pattern.permute.xlu0 0
      %416 = vperm.xlu0 %415, %v310
      %v417 = vpop.permute.xlu0 %416
      %420 = vset.pattern.permute.xlu0 0
      %421 = vperm.xlu0 %420, %v311
      %v422 = vpop.permute.xlu0 %421
      %425 = vset.pattern.permute.xlu0 0
      %426 = vperm.xlu0 %425, %v312
      %v427 = vpop.permute.xlu0 %426
      %430 = vset.pattern.permute.xlu0 0
      %431 = vperm.xlu0 %430, %v313
      %v432 = vpop.permute.xlu0 %431
      %435 = vset.pattern.permute.xlu0 0
      %436 = vperm.xlu0 %435, %v314
      %v437 = vpop.permute.xlu0 %436
      %440 = vset.pattern.permute.xlu0 0
      %441 = vperm.xlu0 %440, %v315
      %v442 = vpop.permute.xlu0 %441
      %445 = vset.pattern.permute.xlu0 0
      %446 = vperm.xlu0 %445, %v316
      %v447 = vpop.permute.xlu0 %446
      %450 = vset.pattern.permute.xlu0 0
      %451 = vperm.xlu0 %450, %v317
      %v452 = vpop.permute.xlu0 %451
      %455 = vset.pattern.permute.xlu0 0
      %456 = vperm.xlu0 %455, %v318
      %v457 = vpop.permute.xlu0 %456
      %460 = vset.pattern.permute.xlu0 0
      %461 = vperm.xlu0 %460, %v319
      %v462 = vpop.permute.xlu0 %461
      %465 = vset.pattern.permute.xlu0 0
      %466 = vperm.xlu0 %465, %v320
      %v467 = vpop.permute.xlu0 %466
      %470 = vset.pattern.permute.xlu0 0
      %471 = vperm.xlu0 %470, %v321
      %v472 = vpop.permute.xlu0 %471
      %475 = vset.pattern.permute.xlu0 0
      %476 = vperm.xlu0 %475, %v322
      %v477 = vpop.permute.xlu0 %476
      %480 = vset.pattern.permute.xlu0 0
      %481 = vperm.xlu0 %480, %v323
      %v482 = vpop.permute.xlu0 %481
      %vm484 = vcmask 261120
      %v486 = vsel %vm484, %v260, 0
      %v489 = vsel %vm484, %v261, 0
      %v492 = vsel %vm484, %v262, 0
      %v495 = vsel %vm484, %v263, 0
      %v498 = vsel %vm484, %v264, 0
      %v501 = vsel %vm484, %v265, 0
      %v504 = vsel %vm484, %v266, 0
      %v507 = vsel %vm484, %v267, 0
      %v510 = vsel %vm484, %v268, 0
      %v513 = vsel %vm484, %v269, 0
      %v516 = vsel %vm484, %v270, 0
      %v519 = vsel %vm484, %v271, 0
      %v522 = vsel %vm484, %v272, 0
      %v525 = vsel %vm484, %v273, 0
      %v528 = vsel %vm484, %v274, 0
      %v531 = vsel %vm484, %v275, 0
      %v534 = vsel %vm484, %v276, 0
      %v537 = vsel %vm484, %v277, 0
      %v540 = vsel %vm484, %v278, 0
      %v543 = vsel %vm484, %v279, 0
      %v546 = vsel %vm484, %v280, 0
      %v549 = vsel %vm484, %v281, 0
      %v552 = vsel %vm484, %v282, 0
      %v555 = vsel %vm484, %v283, 0
      %v558 = vsel %vm484, %v284, 0
      %v561 = vsel %vm484, %v285, 0
      %v564 = vsel %vm484, %v286, 0
      %v567 = vsel %vm484, %v287, 0
      %v570 = vsel %vm484, %v288, 0
      %v573 = vsel %vm484, %v289, 0
      %v576 = vsel %vm484, %v290, 0
      %v579 = vsel %vm484, %v291, 0
      %581 = vmatprep.subr.mxu0 0.0
      %582 = vmatpush1.msra.mxu0 0.0
      %583 = vmatprep.subr.mxu0 0.0
      %584 = vmatpush1.msra.mxu0 0.0
      %585 = vmatprep.subr.mxu0 0.0
      %586 = vmatpush1.msra.mxu0 0.0
      %587 = vmatprep.subr.mxu0 0.0
      %588 = vmatpush1.msra.mxu0 0.0
      %589 = vmatprep.subr.mxu0 0.0
      %590 = vmatpush1.msra.mxu0 0.0
      %591 = vmatprep.subr.mxu0 0.0
      %592 = vmatpush1.msra.mxu0 0.0
      %593 = vmatprep.subr.mxu0 0.0
      %594 = vmatpush1.msra.mxu0 0.0
      %595 = vmatprep.subr.mxu0 0.0
      %596 = vmatpush1.msra.mxu0 0.0
      %597 = vmatprep.subr.mxu0 0.0
      %598 = vmatpush1.msra.mxu0 0.0
      %599 = vmatprep.subr.mxu0 0.0
      %600 = vmatpush1.msra.mxu0 0.0
      %601 = vmatprep.subr.mxu0 0.0
      %602 = vmatpush1.msra.mxu0 0.0
      %603 = vmatprep.subr.mxu0 0.0
      %604 = vmatpush1.msra.mxu0 0.0
      %605 = vmatprep.subr.mxu0 0.0
      %606 = vmatpush1.msra.mxu0 %v259
      %607 = vmatprep.subr.mxu0 0.0
      %608 = vmatpush1.msra.mxu0 %v258
      %609 = vmatprep.subr.mxu0 0.0
      %610 = vmatpush1.msra.mxu0 %v257
      %611 = vmatprep.subr.mxu0 0.0
      %612 = vmatpush1.msra.mxu0 %v256
      %613 = vmatprep.subr.mxu0 0.0
      %614 = vmatpush2.msra.mxu0 0.0
      %615 = vmatprep.subr.mxu0 0.0
      %616 = vmatpush2.msra.mxu0 0.0
      %617 = vmatprep.subr.mxu0 0.0
      %618 = vmatpush2.msra.mxu0 0.0
      %619 = vmatprep.subr.mxu0 0.0
      %620 = vmatpush2.msra.mxu0 0.0
      %621 = vmatprep.subr.mxu0 0.0
      %622 = vmatpush2.msra.mxu0 0.0
      %623 = vmatprep.subr.mxu0 0.0
      %624 = vmatpush2.msra.mxu0 0.0
      %625 = vmatprep.subr.mxu0 0.0
      %626 = vmatpush2.msra.mxu0 0.0
      %627 = vmatprep.subr.mxu0 0.0
      %628 = vmatpush2.msra.mxu0 0.0
      %629 = vmatprep.subr.mxu0 0.0
      %630 = vmatpush2.msra.mxu0 0.0
      %631 = vmatprep.subr.mxu0 0.0
      %632 = vmatpush2.msra.mxu0 0.0
      %633 = vmatprep.subr.mxu0 0.0
      %634 = vmatpush2.msra.mxu0 0.0
      %635 = vmatprep.subr.mxu0 0.0
      %636 = vmatpush2.msra.mxu0 0.0
      %637 = vmatprep.subr.mxu0 0.0
      %638 = vmatpush2.msra.mxu0 0.0
      %639 = vmatprep.subr.mxu0 0.0
      %640 = vmatpush2.msra.mxu0 0.0
      %641 = vmatprep.subr.mxu0 0.0
      %642 = vmatpush2.msra.mxu0 0.0
      %643 = vmatprep.subr.mxu0 0.0
      %644 = vmatpush2.msra.mxu0 0.0
      %645 = vmatprep.mubr.f32.mxu0 0.0
      %646 = vmatmul.mubr.f32.gmra.mxu0 %v486
      %v647 = vpop.f32.mrf.mxu0
      %v648 = vadd.f32 %v327, %v647
      %v649 = vpop.f32.mrf.mxu0
      %650 = vmatprep.mubr.f32.mxu0 0.0
      %651 = vmatmul.mubr.f32.gmra.mxu0 %v489
      %v652 = vpop.f32.mrf.mxu0
      %v653 = vadd.f32 %v332, %v652
      %v654 = vpop.f32.mrf.mxu0
      %655 = vmatprep.mubr.f32.mxu0 0.0
      %656 = vmatmul.mubr.f32.gmra.mxu0 %v492
      %v657 = vpop.f32.mrf.mxu0
      %v658 = vadd.f32 %v337, %v657
      %v659 = vpop.f32.mrf.mxu0
      %660 = vmatprep.mubr.f32.mxu0 0.0
      %661 = vmatmul.mubr.f32.gmra.mxu0 %v495
      %v662 = vpop.f32.mrf.mxu0
      %v663 = vadd.f32 %v342, %v662
      %v664 = vpop.f32.mrf.mxu0
      %665 = vmatprep.mubr.f32.mxu0 0.0
      %666 = vmatmul.mubr.f32.gmra.mxu0 %v498
      %v667 = vpop.f32.mrf.mxu0
      %v668 = vadd.f32 %v347, %v667
      %v669 = vpop.f32.mrf.mxu0
      %670 = vmatprep.mubr.f32.mxu0 0.0
      %671 = vmatmul.mubr.f32.gmra.mxu0 %v501
      %v672 = vpop.f32.mrf.mxu0
      %v673 = vadd.f32 %v352, %v672
      %v674 = vpop.f32.mrf.mxu0
      %675 = vmatprep.mubr.f32.mxu0 0.0
      %676 = vmatmul.mubr.f32.gmra.mxu0 %v504
      %v677 = vpop.f32.mrf.mxu0
      %v678 = vadd.f32 %v357, %v677
      %v679 = vpop.f32.mrf.mxu0
      %680 = vmatprep.mubr.f32.mxu0 0.0
      %681 = vmatmul.mubr.f32.gmra.mxu0 %v507
      %v682 = vpop.f32.mrf.mxu0
      %v683 = vadd.f32 %v362, %v682
      %v684 = vpop.f32.mrf.mxu0
      %685 = vmatprep.mubr.f32.mxu0 0.0
      %686 = vmatmul.mubr.f32.gmra.mxu0 %v510
      %v687 = vpop.f32.mrf.mxu0
      %v688 = vadd.f32 %v367, %v687
      %v689 = vpop.f32.mrf.mxu0
      %690 = vmatprep.mubr.f32.mxu0 0.0
      %691 = vmatmul.mubr.f32.gmra.mxu0 %v513
      %v692 = vpop.f32.mrf.mxu0
      %v693 = vadd.f32 %v372, %v692
      %v694 = vpop.f32.mrf.mxu0
      %695 = vmatprep.mubr.f32.mxu0 0.0
      %696 = vmatmul.mubr.f32.gmra.mxu0 %v516
      %v697 = vpop.f32.mrf.mxu0
      %v698 = vadd.f32 %v377, %v697
      %v699 = vpop.f32.mrf.mxu0
      %700 = vmatprep.mubr.f32.mxu0 0.0
      %701 = vmatmul.mubr.f32.gmra.mxu0 %v519
      %v702 = vpop.f32.mrf.mxu0
      %v703 = vadd.f32 %v382, %v702
      %v704 = vpop.f32.mrf.mxu0
      %705 = vmatprep.mubr.f32.mxu0 0.0
      %706 = vmatmul.mubr.f32.gmra.mxu0 %v522
      %v707 = vpop.f32.mrf.mxu0
      %v708 = vadd.f32 %v387, %v707
      %v709 = vpop.f32.mrf.mxu0
      %710 = vmatprep.mubr.f32.mxu0 0.0
      %711 = vmatmul.mubr.f32.gmra.mxu0 %v525
      %v712 = vpop.f32.mrf.mxu0
      %v713 = vadd.f32 %v392, %v712
      %v714 = vpop.f32.mrf.mxu0
      %715 = vmatprep.mubr.f32.mxu0 0.0
      %716 = vmatmul.mubr.f32.gmra.mxu0 %v528
      %v717 = vpop.f32.mrf.mxu0
      %v718 = vadd.f32 %v397, %v717
      %v719 = vpop.f32.mrf.mxu0
      %720 = vmatprep.mubr.f32.mxu0 0.0
      %721 = vmatmul.mubr.f32.gmra.mxu0 %v531
      %v722 = vpop.f32.mrf.mxu0
      %v723 = vadd.f32 %v402, %v722
      %v724 = vpop.f32.mrf.mxu0
      %725 = vmatprep.mubr.f32.mxu0 0.0
      %726 = vmatmul.mubr.f32.gmra.mxu0 %v534
      %v727 = vpop.f32.mrf.mxu0
      %v728 = vadd.f32 %v407, %v727
      %v729 = vpop.f32.mrf.mxu0
      %730 = vmatprep.mubr.f32.mxu0 0.0
      %731 = vmatmul.mubr.f32.gmra.mxu0 %v537
      %v732 = vpop.f32.mrf.mxu0
      %v733 = vadd.f32 %v412, %v732
      %v734 = vpop.f32.mrf.mxu0
      %735 = vmatprep.mubr.f32.mxu0 0.0
      %736 = vmatmul.mubr.f32.gmra.mxu0 %v540
      %v737 = vpop.f32.mrf.mxu0
      %v738 = vadd.f32 %v417, %v737
      %v739 = vpop.f32.mrf.mxu0
      %740 = vmatprep.mubr.f32.mxu0 0.0
      %741 = vmatmul.mubr.f32.gmra.mxu0 %v543
      %v742 = vpop.f32.mrf.mxu0
      %v743 = vadd.f32 %v422, %v742
      %v744 = vpop.f32.mrf.mxu0
      %745 = vmatprep.mubr.f32.mxu0 0.0
      %746 = vmatmul.mubr.f32.gmra.mxu0 %v546
      %v747 = vpop.f32.mrf.mxu0
      %v748 = vadd.f32 %v427, %v747
      %v749 = vpop.f32.mrf.mxu0
      %750 = vmatprep.mubr.f32.mxu0 0.0
      %751 = vmatmul.mubr.f32.gmra.mxu0 %v549
      %v752 = vpop.f32.mrf.mxu0
      %v753 = vadd.f32 %v432, %v752
      %v754 = vpop.f32.mrf.mxu0
      %755 = vmatprep.mubr.f32.mxu0 0.0
      %756 = vmatmul.mubr.f32.gmra.mxu0 %v552
      %v757 = vpop.f32.mrf.mxu0
      %v758 = vadd.f32 %v437, %v757
      %v759 = vpop.f32.mrf.mxu0
      %760 = vmatprep.mubr.f32.mxu0 0.0
      %761 = vmatmul.mubr.f32.gmra.mxu0 %v555
      %v762 = vpop.f32.mrf.mxu0
      %v763 = vadd.f32 %v442, %v762
      %v764 = vpop.f32.mrf.mxu0
      %765 = vmatprep.mubr.f32.mxu0 0.0
      %766 = vmatmul.mubr.f32.gmra.mxu0 %v558
      %v767 = vpop.f32.mrf.mxu0
      %v768 = vadd.f32 %v447, %v767
      %v769 = vpop.f32.mrf.mxu0
      %770 = vmatprep.mubr.f32.mxu0 0.0
      %771 = vmatmul.mubr.f32.gmra.mxu0 %v561
      %v772 = vpop.f32.mrf.mxu0
      %v773 = vadd.f32 %v452, %v772
      %v774 = vpop.f32.mrf.mxu0
      %775 = vmatprep.mubr.f32.mxu0 0.0
      %776 = vmatmul.mubr.f32.gmra.mxu0 %v564
      %v777 = vpop.f32.mrf.mxu0
      %v778 = vadd.f32 %v457, %v777
      %v779 = vpop.f32.mrf.mxu0
      %780 = vmatprep.mubr.f32.mxu0 0.0
      %781 = vmatmul.mubr.f32.gmra.mxu0 %v567
      %v782 = vpop.f32.mrf.mxu0
      %v783 = vadd.f32 %v462, %v782
      %v784 = vpop.f32.mrf.mxu0
      %785 = vmatprep.mubr.f32.mxu0 0.0
      %786 = vmatmul.mubr.f32.gmra.mxu0 %v570
      %v787 = vpop.f32.mrf.mxu0
      %v788 = vadd.f32 %v467, %v787
      %v789 = vpop.f32.mrf.mxu0
      %790 = vmatprep.mubr.f32.mxu0 0.0
      %791 = vmatmul.mubr.f32.gmra.mxu0 %v573
      %v792 = vpop.f32.mrf.mxu0
      %v793 = vadd.f32 %v472, %v792
      %v794 = vpop.f32.mrf.mxu0
      %795 = vmatprep.mubr.f32.mxu0 0.0
      %796 = vmatmul.mubr.f32.gmra.mxu0 %v576
      %v797 = vpop.f32.mrf.mxu0
      %v798 = vadd.f32 %v477, %v797
      %v799 = vpop.f32.mrf.mxu0
      %800 = vmatprep.mubr.f32.mxu0 0.0
      %801 = vmatmul.mubr.f32.gmra.mxu0 %v579
      %v802 = vpop.f32.mrf.mxu0
      %v803 = vadd.f32 %v482, %v802
      %v804 = vpop.f32.mrf.mxu0
      %805 = vdwg.mxu0
      %v806 = vmul.f32 %v648, 0.5
      %v807 = vmul.f32 %v653, 0.5
      %v808 = vmul.f32 %v658, 0.5
      %v809 = vmul.f32 %v663, 0.5
      %v810 = vmul.f32 %v668, 0.5
      %v811 = vmul.f32 %v673, 0.5
      %v812 = vmul.f32 %v678, 0.5
      %v813 = vmul.f32 %v683, 0.5
      %v814 = vmul.f32 %v688, 0.5
      %v815 = vmul.f32 %v693, 0.5
      %v816 = vmul.f32 %v698, 0.5
      %v817 = vmul.f32 %v703, 0.5
      %v818 = vmul.f32 %v708, 0.5
      %v819 = vmul.f32 %v713, 0.5
      %v820 = vmul.f32 %v718, 0.5
      %v821 = vmul.f32 %v723, 0.5
      %v822 = vmul.f32 %v728, 0.5
      %v823 = vmul.f32 %v733, 0.5
      %v824 = vmul.f32 %v738, 0.5
      %v825 = vmul.f32 %v743, 0.5
      %v826 = vmul.f32 %v748, 0.5
      %v827 = vmul.f32 %v753, 0.5
      %v828 = vmul.f32 %v758, 0.5
      %v829 = vmul.f32 %v763, 0.5
      %v830 = vmul.f32 %v768, 0.5
      %v831 = vmul.f32 %v773, 0.5
      %v832 = vmul.f32 %v778, 0.5
      %v833 = vmul.f32 %v783, 0.5
      %v834 = vmul.f32 %v788, 0.5
      %v835 = vmul.f32 %v793, 0.5
      %v836 = vmul.f32 %v798, 0.5
      %v837 = vmul.f32 %v803, 0.5
      %v838 = vtanh.pop %v806
      %v839 = vtanh.pop %v807
      %v840 = vtanh.pop %v808
      %v841 = vtanh.pop %v809
      %v842 = vtanh.pop %v810
      %v843 = vtanh.pop %v811
      %v844 = vtanh.pop %v812
      %v845 = vtanh.pop %v813
      %v846 = vtanh.pop %v814
      %v847 = vtanh.pop %v815
      %v848 = vtanh.pop %v816
      %v849 = vtanh.pop %v817
      %v850 = vtanh.pop %v818
      %v851 = vtanh.pop %v819
      %v852 = vtanh.pop %v820
      %v853 = vtanh.pop %v821
      %v854 = vtanh.pop %v822
      %v855 = vtanh.pop %v823
      %v856 = vtanh.pop %v824
      %v857 = vtanh.pop %v825
      %v858 = vtanh.pop %v826
      %v859 = vtanh.pop %v827
      %v860 = vtanh.pop %v828
      %v861 = vtanh.pop %v829
      %v862 = vtanh.pop %v830
      %v863 = vtanh.pop %v831
      %v864 = vtanh.pop %v832
      %v865 = vtanh.pop %v833
      %v866 = vtanh.pop %v834
      %v867 = vtanh.pop %v835
      %v868 = vtanh.pop %v836
      %v869 = vtanh.pop %v837
      %v870 = vmul.f32 %v838, 0.5
      %v871 = vmul.f32 %v839, 0.5
      %v872 = vmul.f32 %v840, 0.5
      %v873 = vmul.f32 %v841, 0.5
      %v874 = vmul.f32 %v842, 0.5
      %v875 = vmul.f32 %v843, 0.5
      %v876 = vmul.f32 %v844, 0.5
      %v877 = vmul.f32 %v845, 0.5
      %v878 = vmul.f32 %v846, 0.5
      %v879 = vmul.f32 %v847, 0.5
      %v880 = vmul.f32 %v848, 0.5
      %v881 = vmul.f32 %v849, 0.5
      %v882 = vmul.f32 %v850, 0.5
      %v883 = vmul.f32 %v851, 0.5
      %v884 = vmul.f32 %v852, 0.5
      %v885 = vmul.f32 %v853, 0.5
      %v886 = vmul.f32 %v854, 0.5
      %v887 = vmul.f32 %v855, 0.5
      %v888 = vmul.f32 %v856, 0.5
      %v889 = vmul.f32 %v857, 0.5
      %v890 = vmul.f32 %v858, 0.5
      %v891 = vmul.f32 %v859, 0.5
      %v892 = vmul.f32 %v860, 0.5
      %v893 = vmul.f32 %v861, 0.5
      %v894 = vmul.f32 %v862, 0.5
      %v895 = vmul.f32 %v863, 0.5
      %v896 = vmul.f32 %v864, 0.5
      %v897 = vmul.f32 %v865, 0.5
      %v898 = vmul.f32 %v866, 0.5
      %v899 = vmul.f32 %v867, 0.5
      %v900 = vmul.f32 %v868, 0.5
      %v901 = vmul.f32 %v869, 0.5
      %v902 = vadd.f32 %v870, 0.5
      %v903 = vadd.f32 %v871, 0.5
      %v904 = vadd.f32 %v872, 0.5
      %v905 = vadd.f32 %v873, 0.5
      %v906 = vadd.f32 %v874, 0.5
      %v907 = vadd.f32 %v875, 0.5
      %v908 = vadd.f32 %v876, 0.5
      %v909 = vadd.f32 %v877, 0.5
      %v910 = vadd.f32 %v878, 0.5
      %v911 = vadd.f32 %v879, 0.5
      %v912 = vadd.f32 %v880, 0.5
      %v913 = vadd.f32 %v881, 0.5
      %v914 = vadd.f32 %v882, 0.5
      %v915 = vadd.f32 %v883, 0.5
      %v916 = vadd.f32 %v884, 0.5
      %v917 = vadd.f32 %v885, 0.5
      %v918 = vadd.f32 %v886, 0.5
      %v919 = vadd.f32 %v887, 0.5
      %v920 = vadd.f32 %v888, 0.5
      %v921 = vadd.f32 %v889, 0.5
      %v922 = vadd.f32 %v890, 0.5
      %v923 = vadd.f32 %v891, 0.5
      %v924 = vadd.f32 %v892, 0.5
      %v925 = vadd.f32 %v893, 0.5
      %v926 = vadd.f32 %v894, 0.5
      %v927 = vadd.f32 %v895, 0.5
      %v928 = vadd.f32 %v896, 0.5
      %v929 = vadd.f32 %v897, 0.5
      %v930 = vadd.f32 %v898, 0.5
      %v931 = vadd.f32 %v899, 0.5
      %v932 = vadd.f32 %v900, 0.5
      %v933 = vadd.f32 %v901, 0.5
      %v934 = vmul.f32 %v648, %v902
      %v935 = vmul.f32 %v653, %v903
      %v936 = vmul.f32 %v658, %v904
      %v937 = vmul.f32 %v663, %v905
      %v938 = vmul.f32 %v668, %v906
      %v939 = vmul.f32 %v673, %v907
      %v940 = vmul.f32 %v678, %v908
      %v941 = vmul.f32 %v683, %v909
      %v942 = vmul.f32 %v688, %v910
      %v943 = vmul.f32 %v693, %v911
      %v944 = vmul.f32 %v698, %v912
      %v945 = vmul.f32 %v703, %v913
      %v946 = vmul.f32 %v708, %v914
      %v947 = vmul.f32 %v713, %v915
      %v948 = vmul.f32 %v718, %v916
      %v949 = vmul.f32 %v723, %v917
      %v950 = vmul.f32 %v728, %v918
      %v951 = vmul.f32 %v733, %v919
      %v952 = vmul.f32 %v738, %v920
      %v953 = vmul.f32 %v743, %v921
      %v954 = vmul.f32 %v748, %v922
      %v955 = vmul.f32 %v753, %v923
      %v956 = vmul.f32 %v758, %v924
      %v957 = vmul.f32 %v763, %v925
      %v958 = vmul.f32 %v768, %v926
      %v959 = vmul.f32 %v773, %v927
      %v960 = vmul.f32 %v778, %v928
      %v961 = vmul.f32 %v783, %v929
      %v962 = vmul.f32 %v788, %v930
      %v963 = vmul.f32 %v793, %v931
      %v964 = vmul.f32 %v798, %v932
      %v965 = vmul.f32 %v803, %v933
      %v966 = vld [vmem:[%s3] sm:$0xff]
      %v967 = vld [vmem:[%s3 + $0x8] sm:$0xff]
      %v968 = vld [vmem:[%s3 + $0x10] sm:$0xff]
      %v969 = vld [vmem:[%s3 + $0x18] sm:$0xff]
      %v970 = vld [vmem:[%s3 + $0x20] sm:$0xff]
      %v971 = vld [vmem:[%s3 + $0x28] sm:$0xff]
      %v972 = vld [vmem:[%s3 + $0x30] sm:$0xff]
      %v973 = vld [vmem:[%s3 + $0x38] sm:$0xff]
      %v974 = vld [vmem:[%s4] sm:$0xff]
      %v975 = vld [vmem:[%s4 + $0x8] sm:$0xff]
      %v976 = vld [vmem:[%s4 + $0x10] sm:$0xff]
      %v977 = vld [vmem:[%s4 + $0x18] sm:$0xff]
      %979 = vset.pattern.permute.xlu0 0
      %980 = vperm.xlu0 %979, %v974
      %v981 = vpop.permute.xlu0 %980
      %984 = vset.pattern.permute.xlu0 0
      %985 = vperm.xlu0 %984, %v975
      %v986 = vpop.permute.xlu0 %985
      %989 = vset.pattern.permute.xlu0 0
      %990 = vperm.xlu0 %989, %v976
      %v991 = vpop.permute.xlu0 %990
      %994 = vset.pattern.permute.xlu0 0
      %995 = vperm.xlu0 %994, %v977
      %v996 = vpop.permute.xlu0 %995
      %998 = vmatprep.subr.mxu0 0.0
      %999 = vmatpush1.msra.mxu0 %v949
      %1000 = vmatprep.subr.mxu0 0.0
      %1001 = vmatpush1.msra.mxu0 %v948
      %1002 = vmatprep.subr.mxu0 0.0
      %1003 = vmatpush1.msra.mxu0 %v947
      %1004 = vmatprep.subr.mxu0 0.0
      %1005 = vmatpush1.msra.mxu0 %v946
      %1006 = vmatprep.subr.mxu0 0.0
      %1007 = vmatpush1.msra.mxu0 %v945
      %1008 = vmatprep.subr.mxu0 0.0
      %1009 = vmatpush1.msra.mxu0 %v944
      %1010 = vmatprep.subr.mxu0 0.0
      %1011 = vmatpush1.msra.mxu0 %v943
      %1012 = vmatprep.subr.mxu0 0.0
      %1013 = vmatpush1.msra.mxu0 %v942
      %1014 = vmatprep.subr.mxu0 0.0
      %1015 = vmatpush1.msra.mxu0 %v941
      %1016 = vmatprep.subr.mxu0 0.0
      %1017 = vmatpush1.msra.mxu0 %v940
      %1018 = vmatprep.subr.mxu0 0.0
      %1019 = vmatpush1.msra.mxu0 %v939
      %1020 = vmatprep.subr.mxu0 0.0
      %1021 = vmatpush1.msra.mxu0 %v938
      %1022 = vmatprep.subr.mxu0 0.0
      %1023 = vmatpush1.msra.mxu0 %v937
      %1024 = vmatprep.subr.mxu0 0.0
      %1025 = vmatpush1.msra.mxu0 %v936
      %1026 = vmatprep.subr.mxu0 0.0
      %1027 = vmatpush1.msra.mxu0 %v935
      %1028 = vmatprep.subr.mxu0 0.0
      %1029 = vmatpush1.msra.mxu0 %v934
      %1030 = vmatprep.subr.mxu0 0.0
      %1031 = vmatpush2.msra.mxu0 %v965
      %1032 = vmatprep.subr.mxu0 0.0
      %1033 = vmatpush2.msra.mxu0 %v964
      %1034 = vmatprep.subr.mxu0 0.0
      %1035 = vmatpush2.msra.mxu0 %v963
      %1036 = vmatprep.subr.mxu0 0.0
      %1037 = vmatpush2.msra.mxu0 %v962
      %1038 = vmatprep.subr.mxu0 0.0
      %1039 = vmatpush2.msra.mxu0 %v961
      %1040 = vmatprep.subr.mxu0 0.0
      %1041 = vmatpush2.msra.mxu0 %v960
      %1042 = vmatprep.subr.mxu0 0.0
      %1043 = vmatpush2.msra.mxu0 %v959
      %1044 = vmatprep.subr.mxu0 0.0
      %1045 = vmatpush2.msra.mxu0 %v958
      %1046 = vmatprep.subr.mxu0 0.0
      %1047 = vmatpush2.msra.mxu0 %v957
      %1048 = vmatprep.subr.mxu0 0.0
      %1049 = vmatpush2.msra.mxu0 %v956
      %1050 = vmatprep.subr.mxu0 0.0
      %1051 = vmatpush2.msra.mxu0 %v955
      %1052 = vmatprep.subr.mxu0 0.0
      %1053 = vmatpush2.msra.mxu0 %v954
      %1054 = vmatprep.subr.mxu0 0.0
      %1055 = vmatpush2.msra.mxu0 %v953
      %1056 = vmatprep.subr.mxu0 0.0
      %1057 = vmatpush2.msra.mxu0 %v952
      %1058 = vmatprep.subr.mxu0 0.0
      %1059 = vmatpush2.msra.mxu0 %v951
      %1060 = vmatprep.subr.mxu0 0.0
      %1061 = vmatpush2.msra.mxu0 %v950
      %1062 = vmatprep.mubr.f32.mxu0 %v967
      %1063 = vmatmul.mubr.f32.gmra.mxu0 %v966
      %v1064 = vpop.f32.mrf.mxu0
      %v1065 = vadd.f32 %v981, %v1064
      %v1066 = vpop.f32.mrf.mxu0
      %1067 = vmatprep.mubr.f32.mxu0 %v969
      %1068 = vmatmul.mubr.f32.gmra.mxu0 %v968
      %v1069 = vpop.f32.mrf.mxu0
      %v1070 = vadd.f32 %v986, %v1069
      %v1071 = vpop.f32.mrf.mxu0
      %1072 = vmatprep.mubr.f32.mxu0 %v971
      %1073 = vmatmul.mubr.f32.gmra.mxu0 %v970
      %v1074 = vpop.f32.mrf.mxu0
      %v1075 = vadd.f32 %v991, %v1074
      %v1076 = vpop.f32.mrf.mxu0
      %1077 = vmatprep.mubr.f32.mxu0 %v973
      %1078 = vmatmul.mubr.f32.gmra.mxu0 %v972
      %v1079 = vpop.f32.mrf.mxu0
      %v1080 = vadd.f32 %v996, %v1079
      %v1081 = vpop.f32.mrf.mxu0
      %1082 = vdwg.mxu0
      %v1083 = vadd.f32 %v1065, %v256
      %v1084 = vadd.f32 %v1070, %v257
      %v1085 = vadd.f32 %v1075, %v258
      %v1086 = vadd.f32 %v1080, %v259
      %v1087 = vmul.f32 %v1083, 0.70710677
      %v1088 = vmul.f32 %v1084, 0.70710677
      %v1089 = vmul.f32 %v1085, 0.70710677
      %v1090 = vmul.f32 %v1086, 0.70710677
      %1091 = vst [vmem:[%s255] sm:$0xff] %v1087
      %1092 = vst [vmem:[%s255 + $0x8] sm:$0xff] %v1088
      %1093 = vst [vmem:[%s255 + $0x10] sm:$0xff] %v1089
      %1094 = vst [vmem:[%s255 + $0x18] sm:$0xff] %v1090
      %p1095 = scmp.lt.s32.totalorder %s20, 1
      %s1096 = scalar_select %p1095, %s20, 1
      %p1097 = scmp.lt.s32.totalorder %s21, 0
      %s1098 = scalar_select %p1097, %s21, 0
      %s1099 = smul.addr %s1096, 4
      %s1100 = sadd.s32 %s1098, %s1099
      %s1101 = smul.addr %s1100, 8
      %s1102 = scalar_lea.vmem %s5, %s1101
      // Predicated region
      $region41: #{resconv1x_pallas.1} parent=39 // pred_check
        %p1103 = pneg %p160
      $region42: #{resconv1x_pallas.1} parent=39 // pred_check_branch
        %1105 = sbr.rel (%p1103) target = $region44
      $region43: #{resconv1x_pallas.1} parent=39 // pred_region
        _
      $region44: #{resconv1x_pallas.1} parent=39 // pred_fallthru
        _
    $region40: #{resconv1x_pallas.1} parent=5 // pred_fallthru
      _
    %p1106 = scmp.le.s32.totalorder 2, %s11
    // Predicated region
    $region45: #{resconv1x_pallas.1} parent=5 // pred_check
      %p1107 = pneg %p1106
    $region46: #{resconv1x_pallas.1} parent=5 // pred_check_branch
      %1109 = sbr.rel (%p1107) target = $region48
    $region47: #{resconv1x_pallas.1} parent=5 // pred_region
      %s1110 = ssub.s32 %s11, 2
      // Predicated region
      $region49: #{resconv1x_pallas.1} parent=47 // pred_check
        %p1111 = pneg %p166
      $region50: #{resconv1x_pallas.1} parent=47 // pred_check_branch
        %1113 = sbr.rel (%p1111) target = $region52
      $region51: #{resconv1x_pallas.1} parent=47 // pred_region
        %p1114 = scmp.lt.s32.totalorder %s22, 1
        %s1115 = scalar_select %p1114, %s22, 1
        %p1116 = scmp.lt.s32.totalorder %s23, 0
        %s1117 = scalar_select %p1116, %s23, 0
        %s1118 = smul.addr %s1115, 4
        %s1119 = sadd.s32 %s1117, %s1118
        %s1120 = smul.addr %s1119, 8
        %s1121 = scalar_lea.vmem %s5, %s1120
      $region52: #{resconv1x_pallas.1} parent=47 // pred_fallthru
        _
    $region48: #{resconv1x_pallas.1} parent=5 // pred_fallthru
      _
  $region6: #{resconv1x_pallas.1} parent=0 // loop_footer
    %s15 = sadd.s32 1, %s11
  $region7: #{resconv1x_pallas.1} parent=0 // loop_footer_branch
    %10 = sbr.rel target = $region3
  $region8: #{resconv1x_pallas.1} parent=0 // loop_exit
    _

</llo_original>
